<compile_context>
chip_gen: v6e
topology: v6e:2x2x1
jax: 0.10.0
libtpu: 0.0.40
codegen_flags: <defaults>
</compile_context>

<pallas_src>
import math
from functools import partial

import jax
import jax.numpy as jnp
from jax.experimental import pallas as pl
from jax.experimental.pallas import tpu as pltpu


def mha_kernel(x_ref, wqkv_ref, wp_ref, bp_ref, mask_ref, o_ref, *,
               num_heads, head_size, mxu_dtype):
    bt, T, C = x_ref.shape
    H, hs = num_heads, head_size

    # Fused QKV projection: one (bt*T, C) @ (C, 3C) MXU matmul for all heads.
    # The attention scale is already folded into the Q columns of wqkv.
    x2 = x_ref[...].reshape(bt * T, C).astype(mxu_dtype)
    qkv = jnp.dot(x2, wqkv_ref[...], preferred_element_type=jnp.float32)
    qkv = qkv.astype(mxu_dtype).reshape(bt, T, 3 * C)      # single cast for Q/K/V

    mask_bias = mask_ref[...]                              # (T, T) additive, f32

    # H is small & static -> unrolled; batch rows are batched inside each
    # einsum, so there is no Python loop over bt (bounded code size / vregs).
    outs = []
    for h in range(H):
        q = qkv[:, :, h * hs:(h + 1) * hs]                     # (bt, T, hs)
        k = qkv[:, :, C + h * hs:C + (h + 1) * hs]
        v = qkv[:, :, 2 * C + h * hs:2 * C + (h + 1) * hs]

        # scores: contract last dims (no k transpose materialization)
        s = jnp.einsum('bqd,bkd->bqk', q, k,
                       preferred_element_type=jnp.float32)     # (bt, T, T) f32
        s = s + mask_bias                                      # causal bias

        m = jnp.max(s, axis=-1, keepdims=True)
        p = jnp.exp(s - m)                                     # unnormalized
        denom = jnp.sum(p, axis=-1, keepdims=True)

        o_h = jnp.einsum('bqk,bkd->bqd', p.astype(mxu_dtype), v,
                         preferred_element_type=jnp.float32)   # (bt, T, hs)
        # Normalize after the PV matmul: T*hs multiplies instead of T*T,
        # reciprocal runs on the EUP slot.
        outs.append(o_h * pl.reciprocal(denom, approx=True))

    # Single lane concatenate (no per-head masked partial stores), then the
    # output projection off the concatenated slab.
    cat = jnp.concatenate(outs, axis=-1).reshape(bt * T, C).astype(mxu_dtype)
    proj = jnp.dot(cat, wp_ref[...], preferred_element_type=jnp.float32)
    proj = proj + bp_ref[...]
    o_ref[...] = proj.reshape(bt, T, C).astype(o_ref.dtype)


def multi_head_attention(x, wq, wk, wv, wp, bp, *, block_b=None,
                         mxu_dtype=jnp.bfloat16):
    """x: (B, T, C); wq/wk/wv: (H, C, hs) pre-transposed so y = x @ W[h];
    wp: (C, C); bp: (1, C).

    mxu_dtype: bf16 by default (v5e/v6e/v7x MXU peak; accumulation stays f32);
    pass jnp.float32 for bit-accurate validation.
    """
    B, T, C = x.shape
    H, _, hs = wq.shape
    assert H * hs == C

    # Scale matches the PyTorch module: C**-0.5 (embed size), not hs**-0.5.
    scale = float(C) ** -0.5

    # Fuse per-head projections into one lane-dense (C, 3C) matrix, fold the
    # scale into the Q columns, and cast weights to the MXU input dtype.
    def fuse(w):                                   # (H, C, hs) -> (C, H*hs)
        return jnp.transpose(w, (1, 0, 2)).reshape(C, H * hs)
    wqkv = jnp.concatenate([fuse(wq) * scale, fuse(wk), fuse(wv)],
                           axis=1).astype(mxu_dtype)            # (C, 3C)
    wp_c = wp.astype(mxu_dtype)

    # Additive causal mask (only tril[:T, :T] of the module's block_size buffer
    # matters).  Large finite negative; scores/mask stay f32 so it cannot NaN.
    rows = jnp.arange(T, dtype=jnp.int32)
    mask_bias = jnp.where(rows[None, :] <= rows[:, None],
                          0.0, -1e30).astype(jnp.float32)

    if block_b is None:
        # Fill the MXU M dimension: aim for >= 256 rows per projection matmul.
        block_b = min(B, max(1, -(-256 // T)))
        # Per-step VMEM budget (~8 MiB, sized against v7x's 32 MiB scoped /
        # 64 MiB physical VMEM): x & out blocks double-buffered (4x x block)
        # + the (bt*T, 3C) f32 qkv intermediate (3x) + per-head (bt,T,T) scores.
        def _step_bytes(bt):
            xb = bt * T * C * 4
            return 7 * xb + bt * H * T * T * 4
        while block_b > 1 and _step_bytes(block_b) > (8 << 20):
            block_b = (block_b + 1) // 2
        while B % block_b:
            block_b -= 1
        # v7x has 2 TensorCores: keep at least 2 "parallel" grid steps.
        if B >= 2 and B // block_b < 2:
            block_b = B // 2
            while B % block_b:
                block_b -= 1

    kernel = partial(mha_kernel, num_heads=H, head_size=hs, mxu_dtype=mxu_dtype)

    w_item = jnp.dtype(mxu_dtype).itemsize
    cost = pl.CostEstimate(
        flops=B * (2 * T * C * 3 * C            # fused QKV projection
                   + H * (2 * T * T * hs) * 2   # scores + attn @ V
                   + 2 * T * C * C),            # output projection
        transcendentals=B * H * T * T,          # exp in softmax
        bytes_accessed=(x.size * 4 + wqkv.size * w_item + wp_c.size * w_item
                        + bp.size * 4 + mask_bias.size * 4 + B * T * C * 4),
    )

    return pl.pallas_call(
        kernel,
        out_shape=jax.ShapeDtypeStruct((B, T, C), x.dtype),
        grid_spec=pltpu.PrefetchScalarGridSpec(
            num_scalar_prefetch=0,
            grid=(B // block_b,),
            in_specs=[
                pl.BlockSpec((block_b, T, C), lambda i: (i, 0, 0)),   # x
                pl.BlockSpec((C, 3 * C), lambda i: (0, 0)),           # fused Wqkv
                pl.BlockSpec((C, C), lambda i: (0, 0)),               # Wp
                pl.BlockSpec((1, C), lambda i: (0, 0)),               # proj bias
                pl.BlockSpec((T, T), lambda i: (0, 0)),               # causal bias
            ],
            out_specs=pl.BlockSpec((block_b, T, C), lambda i: (i, 0, 0)),
        ),
        compiler_params=pltpu.CompilerParams(
            dimension_semantics=("parallel",),
            # Above v5e's 16 MiB scoped default; within v7x's 32 MiB scoped
            # budget that the block_b heuristic is sized against.
            vmem_limit_bytes=32 * 1024 * 1024,
        ),
        cost_estimate=cost,
    )(x, wqkv, wp_c, bp, mask_bias)


def reference(x, wq, wk, wv, wp, bp):
    """Pure-JAX f32 reference mirroring the PyTorch forward (dropout = identity)."""
    B, T, C = x.shape
    H = wq.shape[0]
    scale = C ** (-0.5)
    causal = jnp.tril(jnp.ones((T, T), dtype=bool))
    outs = []
    for h in range(H):
        q = x @ wq[h]
        k = x @ wk[h]
        v = x @ wv[h]
        wei = (q @ jnp.swapaxes(k, -2, -1)) * scale
        wei = jnp.where(causal, wei, -jnp.inf)
        wei = jax.nn.softmax(wei, axis=-1)
        outs.append(wei @ v)
    cat = jnp.concatenate(outs, axis=-1)
    return cat @ wp + bp[0]


if __name__ == "__main__":
    # Small shapes consistent with the module.
    B, T = 2, 8
    num_heads, head_size = 4, 8
    embed_size = num_heads * head_size        # 32
    # block_size = 64 in the module; only tril[:T, :T] matters.

    key = jax.random.PRNGKey(0)
    kx, kq, kk, kv, kp, kb = jax.random.split(key, 6)

    x = jax.random.normal(kx, (B, T, embed_size), dtype=jnp.float32)

    # Deterministic "Linear" weights, stored pre-transposed (in, out) so y = x @ W.
    init = 1.0 / math.sqrt(embed_size)
    wq = jax.random.uniform(kq, (num_heads, embed_size, head_size),
                            minval=-init, maxval=init, dtype=jnp.float32)
    wk = jax.random.uniform(kk, (num_heads, embed_size, head_size),
                            minval=-init, maxval=init, dtype=jnp.float32)
    wv = jax.random.uniform(kv, (num_heads, embed_size, head_size),
                            minval=-init, maxval=init, dtype=jnp.float32)
    wp = jax.random.uniform(kp, (embed_size, embed_size),
                            minval=-init, maxval=init, dtype=jnp.float32)
    bp = jax.random.uniform(kb, (1, embed_size),
                            minval=-init, maxval=init, dtype=jnp.float32)

    out = multi_head_attention(x, wq, wk, wv, wp, bp)   # bf16 MXU path
    out = jax.block_until_ready(out)

    ref = reference(x, wq, wk, wv, wp, bp)
    assert out.shape == (B, T, embed_size)
    # Tolerance covers bf16 MXU inputs (f32 accumulation) plus the approximate
    # EUP reciprocal in the softmax normalization (~1e-4 relative).
    assert jnp.allclose(out, ref, atol=3e-2, rtol=3e-2)

    print("KERNEL_OK")
</pallas_src>

<mosaic_0001>
module attributes {stable_mosaic.version = 11 : i64} {
  func.func @mha_kernel(%arg0: i32, %arg1: memref<1x8x32xf32, #tpu.memory_space<vmem>>, %arg2: memref<32x96xbf16, #tpu.memory_space<vmem>>, %arg3: memref<32x32xbf16, #tpu.memory_space<vmem>>, %arg4: memref<1x32xf32, #tpu.memory_space<vmem>>, %arg5: memref<8x8xf32, #tpu.memory_space<vmem>>, %arg6: memref<1x8x32xf32, #tpu.memory_space<vmem>>) attributes {dimension_semantics = [#tpu.dimension_semantics<parallel>], iteration_bounds = array<i64: 2>, scalar_prefetch = 0 : i64, scratch_operands = 0 : i64, tpu.core_type = #tpu.core_type<tc>, window_params = [{transform_indices = @transform_0, window_bounds = array<i64: 1, 8, 32>}, {pipeline_mode = #tpu.pipeline_mode<synchronous>, transform_indices = @transform_1, window_bounds = array<i64: 32, 96>}, {pipeline_mode = #tpu.pipeline_mode<synchronous>, transform_indices = @transform_2, window_bounds = array<i64: 32, 32>}, {pipeline_mode = #tpu.pipeline_mode<synchronous>, transform_indices = @transform_3, window_bounds = array<i64: 1, 32>}, {pipeline_mode = #tpu.pipeline_mode<synchronous>, transform_indices = @transform_4, window_bounds = array<i64: 8, 8>}, {transform_indices = @transform_5, window_bounds = array<i64: 1, 8, 32>}]} {
    %c0 = arith.constant 0 : index
    %c0_0 = arith.constant 0 : index
    %c0_1 = arith.constant 0 : index
    %0 = vector.load %arg1[%c0, %c0_0, %c0_1] : memref<1x8x32xf32, #tpu.memory_space<vmem>>, vector<1x8x32xf32>
    %1 = vector.shape_cast %0 : vector<1x8x32xf32> to vector<8x32xf32>
    %2 = arith.truncf %1 : vector<8x32xf32> to vector<8x32xbf16>
    %c0_2 = arith.constant 0 : index
    %c0_3 = arith.constant 0 : index
    %3 = vector.load %arg2[%c0_2, %c0_3] : memref<32x96xbf16, #tpu.memory_space<vmem>>, vector<32x96xbf16>
    %cst = arith.constant dense<0.000000e+00> : vector<8x96xf32>
    %4 = tpu.matmul %2, %3, %cst {dimension_numbers = #tpu.dot_dimension_numbers<[1], [0], [0], [1], [0, 0, 1, 1], [], []>} : vector<8x32xbf16>, vector<32x96xbf16>, vector<8x96xf32> -> vector<8x96xf32>
    %5 = arith.truncf %4 : vector<8x96xf32> to vector<8x96xbf16>
    %6 = vector.shape_cast %5 : vector<8x96xbf16> to vector<1x8x96xbf16>
    %c0_4 = arith.constant 0 : index
    %c0_5 = arith.constant 0 : index
    %7 = vector.load %arg5[%c0_4, %c0_5] : memref<8x8xf32, #tpu.memory_space<vmem>>, vector<8x8xf32>
    %8 = vector.extract_strided_slice %6 {offsets = [0, 0, 0], sizes = [1, 8, 8], strides = [1, 1, 1]} : vector<1x8x96xbf16> to vector<1x8x8xbf16>
    %9 = vector.extract_strided_slice %6 {offsets = [0, 0, 32], sizes = [1, 8, 8], strides = [1, 1, 1]} : vector<1x8x96xbf16> to vector<1x8x8xbf16>
    %10 = vector.extract_strided_slice %6 {offsets = [0, 0, 64], sizes = [1, 8, 8], strides = [1, 1, 1]} : vector<1x8x96xbf16> to vector<1x8x8xbf16>
    "tpu.trace_start"() <{level = 10 : i32, message = "bqd,bkd->bqk"}> : () -> ()
    %cst_6 = arith.constant dense<0.000000e+00> : vector<1x8x8xf32>
    %11 = tpu.matmul %8, %9, %cst_6 {dimension_numbers = #tpu.dot_dimension_numbers<[2], [2], [1], [1], [0, 0, 0, 1, 1, 1], [0], [0]>} : vector<1x8x8xbf16>, vector<1x8x8xbf16>, vector<1x8x8xf32> -> vector<1x8x8xf32>
    "tpu.trace_stop"() : () -> ()
    %12 = vector.shape_cast %7 : vector<8x8xf32> to vector<1x8x8xf32>
    %13 = arith.addf %11, %12 : vector<1x8x8xf32>
    %cst_7 = arith.constant dense<0xFF800000> : vector<1x8xf32>
    %14 = vector.multi_reduction <maximumf>, %13, %cst_7 [2] : vector<1x8x8xf32> to vector<1x8xf32>
    %15 = vector.shape_cast %14 : vector<1x8xf32> to vector<1x8x1xf32>
    %16 = vector.broadcast %15 : vector<1x8x1xf32> to vector<1x8x8xf32>
    %17 = arith.subf %13, %16 : vector<1x8x8xf32>
    %18 = math.exp %17 : vector<1x8x8xf32>
    %cst_8 = arith.constant dense<0.000000e+00> : vector<1x8xf32>
    %19 = vector.multi_reduction <add>, %18, %cst_8 [2] : vector<1x8x8xf32> to vector<1x8xf32>
    %20 = vector.shape_cast %19 : vector<1x8xf32> to vector<1x8x1xf32>
    %21 = arith.truncf %18 : vector<1x8x8xf32> to vector<1x8x8xbf16>
    "tpu.trace_start"() <{level = 10 : i32, message = "bqk,bkd->bqd"}> : () -> ()
    %cst_9 = arith.constant dense<0.000000e+00> : vector<1x8x8xf32>
    %22 = tpu.matmul %21, %10, %cst_9 {dimension_numbers = #tpu.dot_dimension_numbers<[2], [1], [1], [2], [0, 0, 0, 1, 1, 2], [0], [0]>} : vector<1x8x8xbf16>, vector<1x8x8xbf16>, vector<1x8x8xf32> -> vector<1x8x8xf32>
    "tpu.trace_stop"() : () -> ()
    %23 = tpu.reciprocal %20 {approx = true} : vector<1x8x1xf32> -> vector<1x8x1xf32>
    %24 = vector.broadcast %23 : vector<1x8x1xf32> to vector<1x8x8xf32>
    %25 = arith.mulf %22, %24 : vector<1x8x8xf32>
    %26 = vector.extract_strided_slice %6 {offsets = [0, 0, 8], sizes = [1, 8, 8], strides = [1, 1, 1]} : vector<1x8x96xbf16> to vector<1x8x8xbf16>
    %27 = vector.extract_strided_slice %6 {offsets = [0, 0, 40], sizes = [1, 8, 8], strides = [1, 1, 1]} : vector<1x8x96xbf16> to vector<1x8x8xbf16>
    %28 = vector.extract_strided_slice %6 {offsets = [0, 0, 72], sizes = [1, 8, 8], strides = [1, 1, 1]} : vector<1x8x96xbf16> to vector<1x8x8xbf16>
    "tpu.trace_start"() <{level = 10 : i32, message = "bqd,bkd->bqk"}> : () -> ()
    %cst_10 = arith.constant dense<0.000000e+00> : vector<1x8x8xf32>
    %29 = tpu.matmul %26, %27, %cst_10 {dimension_numbers = #tpu.dot_dimension_numbers<[2], [2], [1], [1], [0, 0, 0, 1, 1, 1], [0], [0]>} : vector<1x8x8xbf16>, vector<1x8x8xbf16>, vector<1x8x8xf32> -> vector<1x8x8xf32>
    "tpu.trace_stop"() : () -> ()
    %30 = vector.shape_cast %7 : vector<8x8xf32> to vector<1x8x8xf32>
    %31 = arith.addf %29, %30 : vector<1x8x8xf32>
    %cst_11 = arith.constant dense<0xFF800000> : vector<1x8xf32>
    %32 = vector.multi_reduction <maximumf>, %31, %cst_11 [2] : vector<1x8x8xf32> to vector<1x8xf32>
    %33 = vector.shape_cast %32 : vector<1x8xf32> to vector<1x8x1xf32>
    %34 = vector.broadcast %33 : vector<1x8x1xf32> to vector<1x8x8xf32>
    %35 = arith.subf %31, %34 : vector<1x8x8xf32>
    %36 = math.exp %35 : vector<1x8x8xf32>
    %cst_12 = arith.constant dense<0.000000e+00> : vector<1x8xf32>
    %37 = vector.multi_reduction <add>, %36, %cst_12 [2] : vector<1x8x8xf32> to vector<1x8xf32>
    %38 = vector.shape_cast %37 : vector<1x8xf32> to vector<1x8x1xf32>
    %39 = arith.truncf %36 : vector<1x8x8xf32> to vector<1x8x8xbf16>
    "tpu.trace_start"() <{level = 10 : i32, message = "bqk,bkd->bqd"}> : () -> ()
    %cst_13 = arith.constant dense<0.000000e+00> : vector<1x8x8xf32>
    %40 = tpu.matmul %39, %28, %cst_13 {dimension_numbers = #tpu.dot_dimension_numbers<[2], [1], [1], [2], [0, 0, 0, 1, 1, 2], [0], [0]>} : vector<1x8x8xbf16>, vector<1x8x8xbf16>, vector<1x8x8xf32> -> vector<1x8x8xf32>
    "tpu.trace_stop"() : () -> ()
    %41 = tpu.reciprocal %38 {approx = true} : vector<1x8x1xf32> -> vector<1x8x1xf32>
    %42 = vector.broadcast %41 : vector<1x8x1xf32> to vector<1x8x8xf32>
    %43 = arith.mulf %40, %42 : vector<1x8x8xf32>
    %44 = vector.extract_strided_slice %6 {offsets = [0, 0, 16], sizes = [1, 8, 8], strides = [1, 1, 1]} : vector<1x8x96xbf16> to vector<1x8x8xbf16>
    %45 = vector.extract_strided_slice %6 {offsets = [0, 0, 48], sizes = [1, 8, 8], strides = [1, 1, 1]} : vector<1x8x96xbf16> to vector<1x8x8xbf16>
    %46 = vector.extract_strided_slice %6 {offsets = [0, 0, 80], sizes = [1, 8, 8], strides = [1, 1, 1]} : vector<1x8x96xbf16> to vector<1x8x8xbf16>
    "tpu.trace_start"() <{level = 10 : i32, message = "bqd,bkd->bqk"}> : () -> ()
    %cst_14 = arith.constant dense<0.000000e+00> : vector<1x8x8xf32>
    %47 = tpu.matmul %44, %45, %cst_14 {dimension_numbers = #tpu.dot_dimension_numbers<[2], [2], [1], [1], [0, 0, 0, 1, 1, 1], [0], [0]>} : vector<1x8x8xbf16>, vector<1x8x8xbf16>, vector<1x8x8xf32> -> vector<1x8x8xf32>
    "tpu.trace_stop"() : () -> ()
    %48 = vector.shape_cast %7 : vector<8x8xf32> to vector<1x8x8xf32>
    %49 = arith.addf %47, %48 : vector<1x8x8xf32>
    %cst_15 = arith.constant dense<0xFF800000> : vector<1x8xf32>
    %50 = vector.multi_reduction <maximumf>, %49, %cst_15 [2] : vector<1x8x8xf32> to vector<1x8xf32>
    %51 = vector.shape_cast %50 : vector<1x8xf32> to vector<1x8x1xf32>
    %52 = vector.broadcast %51 : vector<1x8x1xf32> to vector<1x8x8xf32>
    %53 = arith.subf %49, %52 : vector<1x8x8xf32>
    %54 = math.exp %53 : vector<1x8x8xf32>
    %cst_16 = arith.constant dense<0.000000e+00> : vector<1x8xf32>
    %55 = vector.multi_reduction <add>, %54, %cst_16 [2] : vector<1x8x8xf32> to vector<1x8xf32>
    %56 = vector.shape_cast %55 : vector<1x8xf32> to vector<1x8x1xf32>
    %57 = arith.truncf %54 : vector<1x8x8xf32> to vector<1x8x8xbf16>
    "tpu.trace_start"() <{level = 10 : i32, message = "bqk,bkd->bqd"}> : () -> ()
    %cst_17 = arith.constant dense<0.000000e+00> : vector<1x8x8xf32>
    %58 = tpu.matmul %57, %46, %cst_17 {dimension_numbers = #tpu.dot_dimension_numbers<[2], [1], [1], [2], [0, 0, 0, 1, 1, 2], [0], [0]>} : vector<1x8x8xbf16>, vector<1x8x8xbf16>, vector<1x8x8xf32> -> vector<1x8x8xf32>
    "tpu.trace_stop"() : () -> ()
    %59 = tpu.reciprocal %56 {approx = true} : vector<1x8x1xf32> -> vector<1x8x1xf32>
    %60 = vector.broadcast %59 : vector<1x8x1xf32> to vector<1x8x8xf32>
    %61 = arith.mulf %58, %60 : vector<1x8x8xf32>
    %62 = vector.extract_strided_slice %6 {offsets = [0, 0, 24], sizes = [1, 8, 8], strides = [1, 1, 1]} : vector<1x8x96xbf16> to vector<1x8x8xbf16>
    %63 = vector.extract_strided_slice %6 {offsets = [0, 0, 56], sizes = [1, 8, 8], strides = [1, 1, 1]} : vector<1x8x96xbf16> to vector<1x8x8xbf16>
    %64 = vector.extract_strided_slice %6 {offsets = [0, 0, 88], sizes = [1, 8, 8], strides = [1, 1, 1]} : vector<1x8x96xbf16> to vector<1x8x8xbf16>
    "tpu.trace_start"() <{level = 10 : i32, message = "bqd,bkd->bqk"}> : () -> ()
    %cst_18 = arith.constant dense<0.000000e+00> : vector<1x8x8xf32>
    %65 = tpu.matmul %62, %63, %cst_18 {dimension_numbers = #tpu.dot_dimension_numbers<[2], [2], [1], [1], [0, 0, 0, 1, 1, 1], [0], [0]>} : vector<1x8x8xbf16>, vector<1x8x8xbf16>, vector<1x8x8xf32> -> vector<1x8x8xf32>
    "tpu.trace_stop"() : () -> ()
    %66 = vector.shape_cast %7 : vector<8x8xf32> to vector<1x8x8xf32>
    %67 = arith.addf %65, %66 : vector<1x8x8xf32>
    %cst_19 = arith.constant dense<0xFF800000> : vector<1x8xf32>
    %68 = vector.multi_reduction <maximumf>, %67, %cst_19 [2] : vector<1x8x8xf32> to vector<1x8xf32>
    %69 = vector.shape_cast %68 : vector<1x8xf32> to vector<1x8x1xf32>
    %70 = vector.broadcast %69 : vector<1x8x1xf32> to vector<1x8x8xf32>
    %71 = arith.subf %67, %70 : vector<1x8x8xf32>
    %72 = math.exp %71 : vector<1x8x8xf32>
    %cst_20 = arith.constant dense<0.000000e+00> : vector<1x8xf32>
    %73 = vector.multi_reduction <add>, %72, %cst_20 [2] : vector<1x8x8xf32> to vector<1x8xf32>
    %74 = vector.shape_cast %73 : vector<1x8xf32> to vector<1x8x1xf32>
    %75 = arith.truncf %72 : vector<1x8x8xf32> to vector<1x8x8xbf16>
    "tpu.trace_start"() <{level = 10 : i32, message = "bqk,bkd->bqd"}> : () -> ()
    %cst_21 = arith.constant dense<0.000000e+00> : vector<1x8x8xf32>
    %76 = tpu.matmul %75, %64, %cst_21 {dimension_numbers = #tpu.dot_dimension_numbers<[2], [1], [1], [2], [0, 0, 0, 1, 1, 2], [0], [0]>} : vector<1x8x8xbf16>, vector<1x8x8xbf16>, vector<1x8x8xf32> -> vector<1x8x8xf32>
    "tpu.trace_stop"() : () -> ()
    %77 = tpu.reciprocal %74 {approx = true} : vector<1x8x1xf32> -> vector<1x8x1xf32>
    %78 = vector.broadcast %77 : vector<1x8x1xf32> to vector<1x8x8xf32>
    %79 = arith.mulf %76, %78 : vector<1x8x8xf32>
    %80 = tpu.concatenate %25, %43, %61, %79 in 2 : vector<1x8x8xf32>, vector<1x8x8xf32>, vector<1x8x8xf32>, vector<1x8x8xf32> -> vector<1x8x32xf32>
    %81 = vector.shape_cast %80 : vector<1x8x32xf32> to vector<8x32xf32>
    %82 = arith.truncf %81 : vector<8x32xf32> to vector<8x32xbf16>
    %c0_22 = arith.constant 0 : index
    %c0_23 = arith.constant 0 : index
    %83 = vector.load %arg3[%c0_22, %c0_23] : memref<32x32xbf16, #tpu.memory_space<vmem>>, vector<32x32xbf16>
    %cst_24 = arith.constant dense<0.000000e+00> : vector<8x32xf32>
    %84 = tpu.matmul %82, %83, %cst_24 {dimension_numbers = #tpu.dot_dimension_numbers<[1], [0], [0], [1], [0, 0, 1, 1], [], []>} : vector<8x32xbf16>, vector<32x32xbf16>, vector<8x32xf32> -> vector<8x32xf32>
    %c0_25 = arith.constant 0 : index
    %c0_26 = arith.constant 0 : index
    %85 = vector.load %arg4[%c0_25, %c0_26] : memref<1x32xf32, #tpu.memory_space<vmem>>, vector<1x32xf32>
    %86 = vector.broadcast %85 : vector<1x32xf32> to vector<8x32xf32>
    %87 = arith.addf %84, %86 : vector<8x32xf32>
    %88 = vector.shape_cast %87 : vector<8x32xf32> to vector<1x8x32xf32>
    %c0_27 = arith.constant 0 : index
    %c0_28 = arith.constant 0 : index
    %c0_29 = arith.constant 0 : index
    %89 = vector.load %arg6[%c0_27, %c0_28, %c0_29] : memref<1x8x32xf32, #tpu.memory_space<vmem>>, vector<1x8x32xf32>
    tpu.vector_store %arg6[%c0_27, %c0_28, %c0_29], %88 {strides = array<i32>} : memref<1x8x32xf32, #tpu.memory_space<vmem>>, vector<1x8x32xf32>,
    return
  }
  func.func @transform_0(%arg0: i32) -> (i32, i32, i32) {
    %c0_i32 = arith.constant 0 : i32
    %c0_i32_0 = arith.constant 0 : i32
    %c0_i32_1 = arith.constant 0 : i32
    return %arg0, %c0_i32, %c0_i32_0 : i32, i32, i32
  }
  func.func @transform_1(%arg0: i32) -> (i32, i32) {
    %c0_i32 = arith.constant 0 : i32
    %c0_i32_0 = arith.constant 0 : i32
    %c0_i32_1 = arith.constant 0 : i32
    return %c0_i32, %c0_i32_0 : i32, i32
  }
  func.func @transform_2(%arg0: i32) -> (i32, i32) {
    %c0_i32 = arith.constant 0 : i32
    %c0_i32_0 = arith.constant 0 : i32
    %c0_i32_1 = arith.constant 0 : i32
    return %c0_i32, %c0_i32_0 : i32, i32
  }
  func.func @transform_3(%arg0: i32) -> (i32, i32) {
    %c0_i32 = arith.constant 0 : i32
    %c0_i32_0 = arith.constant 0 : i32
    %c0_i32_1 = arith.constant 0 : i32
    return %c0_i32, %c0_i32_0 : i32, i32
  }
  func.func @transform_4(%arg0: i32) -> (i32, i32) {
    %c0_i32 = arith.constant 0 : i32
    %c0_i32_0 = arith.constant 0 : i32
    %c0_i32_1 = arith.constant 0 : i32
    return %c0_i32, %c0_i32_0 : i32, i32
  }
  func.func @transform_5(%arg0: i32) -> (i32, i32, i32) {
    %c0_i32 = arith.constant 0 : i32
    %c0_i32_0 = arith.constant 0 : i32
    %c0_i32_1 = arith.constant 0 : i32
    return %arg0, %c0_i32, %c0_i32_0 : i32, i32, i32
  }
}

</mosaic_0001>

<llo_original>
// kernel: tpu_custom_call.1
$region0: #{tpu_custom_call.1}
  #allocation0 [shape = 'u32[]', space=smem, size = 0x4, offset = 0x4, fixed_abs, tag = 'smem constant byte address 0x4 - core index']
  #allocation1 [shape = 'u32[144,128]{1,0:T(1,128)}', space=vmem, size = 0x12000, scoped, tag = 'internal scratch']
  %s0 = inlined_call_operand.hbm [shape: f32[2,8,32], index: 0, kind: input, shape index: {}]
  %s1 = inlined_call_operand.hbm [shape: bf16[32,96], index: 1, kind: input, shape index: {}]
  %s2 = inlined_call_operand.hbm [shape: bf16[32,32], index: 2, kind: input, shape index: {}]
  %s3 = inlined_call_operand.vmem [shape: f32[1,32], index: 3, kind: input, shape index: {}]
  %s4 = inlined_call_operand.hbm [shape: f32[8,8], index: 4, kind: input, shape index: {}]
  %s5 = inlined_call_operand.hbm [shape: f32[2,8,32], index: 5, kind: output, shape index: {}]
  %s6 = sld [smem:[#allocation0]]
  $region69: #{tpu_custom_call.1} parent=0
    _
  %s8 = ssub.s32 1, %s6
  %s9 = scalar_select 0, %s8, %s6
  $region1: #{tpu_custom_call.1} parent=0
    #allocation2 [shape = 'u8[8192]{0}', space=vmem, size = 0x2000, scoped, tag = 'input window, operand 0']
    #allocation3 [shape = 's32[2]{0}', space=sflag, size = 0x8, scoped, tag = 'scoped memory for tpu_custom_call.1']
    #allocation4 [shape = 's32[2]{0}', space=sflag, size = 0x8, scoped, tag = 'scoped memory for tpu_custom_call.1']
    #allocation5 [shape = 'u8[8192]{0}', space=vmem, size = 0x2000, scoped, tag = 'input window, operand 1, single buffered']
    #allocation6 [shape = 's32[1]{0}', space=sflag, size = 0x4, scoped, tag = 'scoped memory for tpu_custom_call.1']
    #allocation7 [shape = 'u8[8192]{0}', space=vmem, size = 0x2000, scoped, tag = 'input window, operand 2, single buffered']
    #allocation8 [shape = 'u8[4096]{0}', space=vmem, size = 0x1000, scoped, tag = 'input window, operand 4, single buffered']
    #allocation9 [shape = 's32[1]{0}', space=sflag, size = 0x4, scoped, tag = 'scoped memory for tpu_custom_call.1']
    #allocation10 [shape = 'u8[8192]{0}', space=vmem, size = 0x2000, scoped, tag = 'output window, operand 0']
    %10 = vsyncpa [#allocation3], 0
    %s11 = scalar_lea.sflag [#allocation3], 1
    %12 = vsyncpa %s11, 0
    %13 = vsyncpa [#allocation6], 0
    %14 = vsyncpa [#allocation9], 0
    %15 = vsyncpa [#allocation4], 0
    %s16 = scalar_lea.sflag [#allocation4], 1
    %17 = vsyncpa %s16, 0
    loop: start=0, step=1, limit=4
    $region2: #{tpu_custom_call.1} parent=1 // loop_pre_header
      _
    $region3: #{tpu_custom_call.1} parent=1 // loop_header
      %s19 = sphi 0, %s23
      %p20 = scmp.ge.s32.totalorder %s19, 4
      %s29 = sphi 0, %s31
      %s32 = sphi 0, %s29
      %s33 = sphi 0, %s32
      %s49 = sphi 0, %s33
      %s53 = sphi 0, %s53
      %s55 = sphi 0, %s53
      %s56 = sphi 0, %s55
      %s70 = sphi 0, %s56
      %s74 = sphi 0, %s74
      %s76 = sphi 0, %s74
      %s77 = sphi 0, %s76
      %s91 = sphi 0, %s77
      %s95 = sphi 0, %s95
      %s97 = sphi 0, %s95
      %s98 = sphi 0, %s97
      %s112 = sphi 0, %s98
      %s116 = sphi 0, %s116
      %s118 = sphi 0, %s116
      %s119 = sphi 0, %s118
      %s133 = sphi 0, %s119
      %s139 = sphi 0, %s141
      %s142 = sphi 0, %s139
      %s143 = sphi 0, %s142
      %s159 = sphi 0, %s143
    $region4: #{tpu_custom_call.1} parent=1 // loop_header_branch
      %22 = sbr.rel (%p20) target = $region8
    $region5: #{tpu_custom_call.1} parent=1 // loop_body
      %s24 = ssub.s32 %s19, 1
      %s25 = ssub.s32 %s19, 2
      %s26 = sadd.s32 %s19, 1
      %s27 = ssub.s32 %s19, %s26
      %p28 = scmp.eq.s32.totalorder %s27, 0
      %s30 = sadd.s32 %s29, 1
      %s31 = scalar_select %p28, %s29, %s30
      %p34 = pneg %p28
      %p35 = scmp.eq.s32.totalorder %s19, 1
      %p36 = por %p34, %p35
      %p37 = scmp.ne.s32.totalorder %s29, %s32
      %p38 = scmp.eq.s32.totalorder %s19, 0
      %p39 = por %p37, %p38
      %p40 = scmp.ne.s32.totalorder %s29, %s32
      %p41 = scmp.eq.s32.totalorder %s24, 1
      %p42 = por %p40, %p41
      %p43 = scmp.ne.s32.totalorder %s32, %s33
      %p44 = scmp.eq.s32.totalorder %s24, 0
      %p45 = por %p43, %p44
      %p46 = scmp.ne.s32.totalorder %s32, %s33
      %p47 = scmp.eq.s32.totalorder %s25, 1
      %p48 = por %p46, %p47
      %p50 = scmp.ne.s32.totalorder %s33, %s49
      %p51 = scmp.eq.s32.totalorder %s25, 0
      %p52 = por %p50, %p51
      %s54 = sadd.s32 %s53, 1
      %p57 = scmp.eq.s32.totalorder %s19, 1
      %p58 = scmp.ne.s32.totalorder %s53, %s55
      %p59 = scmp.eq.s32.totalorder %s19, 0
      %p60 = por %p58, %p59
      %p61 = scmp.ne.s32.totalorder %s53, %s55
      %p62 = scmp.eq.s32.totalorder %s24, 1
      %p63 = por %p61, %p62
      %p64 = scmp.ne.s32.totalorder %s55, %s56
      %p65 = scmp.eq.s32.totalorder %s24, 0
      %p66 = por %p64, %p65
      %p67 = scmp.ne.s32.totalorder %s55, %s56
      %p68 = scmp.eq.s32.totalorder %s25, 1
      %p69 = por %p67, %p68
      %p71 = scmp.ne.s32.totalorder %s56, %s70
      %p72 = scmp.eq.s32.totalorder %s25, 0
      %p73 = por %p71, %p72
      %s75 = sadd.s32 %s74, 1
      %p78 = scmp.eq.s32.totalorder %s19, 1
      %p79 = scmp.ne.s32.totalorder %s74, %s76
      %p80 = scmp.eq.s32.totalorder %s19, 0
      %p81 = por %p79, %p80
      %p82 = scmp.ne.s32.totalorder %s74, %s76
      %p83 = scmp.eq.s32.totalorder %s24, 1
      %p84 = por %p82, %p83
      %p85 = scmp.ne.s32.totalorder %s76, %s77
      %p86 = scmp.eq.s32.totalorder %s24, 0
      %p87 = por %p85, %p86
      %p88 = scmp.ne.s32.totalorder %s76, %s77
      %p89 = scmp.eq.s32.totalorder %s25, 1
      %p90 = por %p88, %p89
      %p92 = scmp.ne.s32.totalorder %s77, %s91
      %p93 = scmp.eq.s32.totalorder %s25, 0
      %p94 = por %p92, %p93
      %s96 = sadd.s32 %s95, 1
      %p99 = scmp.eq.s32.totalorder %s19, 1
      %p100 = scmp.ne.s32.totalorder %s95, %s97
      %p101 = scmp.eq.s32.totalorder %s19, 0
      %p102 = por %p100, %p101
      %p103 = scmp.ne.s32.totalorder %s95, %s97
      %p104 = scmp.eq.s32.totalorder %s24, 1
      %p105 = por %p103, %p104
      %p106 = scmp.ne.s32.totalorder %s97, %s98
      %p107 = scmp.eq.s32.totalorder %s24, 0
      %p108 = por %p106, %p107
      %p109 = scmp.ne.s32.totalorder %s97, %s98
      %p110 = scmp.eq.s32.totalorder %s25, 1
      %p111 = por %p109, %p110
      %p113 = scmp.ne.s32.totalorder %s98, %s112
      %p114 = scmp.eq.s32.totalorder %s25, 0
      %p115 = por %p113, %p114
      %s117 = sadd.s32 %s116, 1
      %p120 = scmp.eq.s32.totalorder %s19, 1
      %p121 = scmp.ne.s32.totalorder %s116, %s118
      %p122 = scmp.eq.s32.totalorder %s19, 0
      %p123 = por %p121, %p122
      %p124 = scmp.ne.s32.totalorder %s116, %s118
      %p125 = scmp.eq.s32.totalorder %s24, 1
      %p126 = por %p124, %p125
      %p127 = scmp.ne.s32.totalorder %s118, %s119
      %p128 = scmp.eq.s32.totalorder %s24, 0
      %p129 = por %p127, %p128
      %p130 = scmp.ne.s32.totalorder %s118, %s119
      %p131 = scmp.eq.s32.totalorder %s25, 1
      %p132 = por %p130, %p131
      %p134 = scmp.ne.s32.totalorder %s119, %s133
      %p135 = scmp.eq.s32.totalorder %s25, 0
      %p136 = por %p134, %p135
      %s137 = ssub.s32 %s19, %s26
      %p138 = scmp.eq.s32.totalorder %s137, 0
      %s140 = sadd.s32 %s139, 1
      %s141 = scalar_select %p138, %s139, %s140
      %p144 = pneg %p138
      %p145 = scmp.eq.s32.totalorder %s19, 1
      %p146 = por %p144, %p145
      %p147 = scmp.ne.s32.totalorder %s139, %s142
      %p148 = scmp.eq.s32.totalorder %s19, 0
      %p149 = por %p147, %p148
      %p150 = scmp.ne.s32.totalorder %s139, %s142
      %p151 = scmp.eq.s32.totalorder %s24, 1
      %p152 = por %p150, %p151
      %p153 = scmp.ne.s32.totalorder %s142, %s143
      %p154 = scmp.eq.s32.totalorder %s24, 0
      %p155 = por %p153, %p154
      %p156 = scmp.ne.s32.totalorder %s142, %s143
      %p157 = scmp.eq.s32.totalorder %s25, 1
      %p158 = por %p156, %p157
      %p160 = scmp.ne.s32.totalorder %s143, %s159
      %p161 = scmp.eq.s32.totalorder %s25, 0
      %p162 = por %p160, %p161
      %p163 = scmp.le.s32.totalorder 1, %s19
      %p164 = scmp.lt.s32.totalorder %s19, 3
      %p165 = pnand %p163, %p164
      %p166 = pneg %p165
      // Predicated region
      $region9: #{tpu_custom_call.1} parent=5 // pred_check
        _
      $region10: #{tpu_custom_call.1} parent=5 // pred_check_branch
        %168 = sbr.rel (%p165) target = $region12
      $region11: #{tpu_custom_call.1} parent=5 // pred_region
        %s169 = ssub.s32 %s19, 1
        // Predicated region
        $region13: #{tpu_custom_call.1} parent=11 // pred_check
          %p170 = pneg %p66
        $region14: #{tpu_custom_call.1} parent=11 // pred_check_branch
          %172 = sbr.rel (%p170) target = $region16
        $region15: #{tpu_custom_call.1} parent=11 // pred_region
          %s174 = ssub.s32 256, 256
          %175 = vsyncadd [#allocation6], %s174
          %s176 = sshll.u32 [#allocation5], 4
          %s177 = int_to_ptr.vmem [resolvable:$true] %s176
          %182 = dma.hbm_to_vmem [thread:$0]  %s1, 256, %s177, [#allocation6], 64, 64, 4
        $region16: #{tpu_custom_call.1} parent=11 // pred_fallthru
          _
        // Predicated region
        $region17: #{tpu_custom_call.1} parent=11 // pred_check
          %p183 = pneg %p87
        $region18: #{tpu_custom_call.1} parent=11 // pred_check_branch
          %185 = sbr.rel (%p183) target = $region20
        $region19: #{tpu_custom_call.1} parent=11 // pred_region
          %s187 = ssub.s32 256, 256
          %188 = vsyncadd [#allocation6], %s187
          %s189 = sshll.u32 [#allocation7], 4
          %s190 = int_to_ptr.vmem [resolvable:$true] %s189
          %195 = dma.hbm_to_vmem [thread:$0]  %s2, 256, %s190, [#allocation6], 64, 64, 4
        $region20: #{tpu_custom_call.1} parent=11 // pred_fallthru
          _
        // Predicated region
        $region21: #{tpu_custom_call.1} parent=11 // pred_check
          %p196 = pneg %p108
        $region22: #{tpu_custom_call.1} parent=11 // pred_check_branch
          %198 = sbr.rel (%p196) target = $region24
        $region23: #{tpu_custom_call.1} parent=11 // pred_region
          _
        $region24: #{tpu_custom_call.1} parent=11 // pred_fallthru
          _
        // Predicated region
        $region25: #{tpu_custom_call.1} parent=11 // pred_check
          %p199 = pneg %p129
        $region26: #{tpu_custom_call.1} parent=11 // pred_check_branch
          %201 = sbr.rel (%p199) target = $region28
        $region27: #{tpu_custom_call.1} parent=11 // pred_region
          %s203 = ssub.s32 128, 128
          %204 = vsyncadd [#allocation9], %s203
          %s206 = sshll.u32 [#allocation8], 4
          %s207 = int_to_ptr.vmem [resolvable:$true] %s206
          %209 = dma.hbm_to_vmem [thread:$0]  %s4, 128, %s207, [#allocation9]
        $region28: #{tpu_custom_call.1} parent=11 // pred_fallthru
          _
      $region12: #{tpu_custom_call.1} parent=5 // pred_fallthru
        _
      %p210 = scmp.lt.s32.totalorder %s19, 2
      // Predicated region
      $region29: #{tpu_custom_call.1} parent=5 // pred_check
        %p211 = pneg %p210
      $region30: #{tpu_custom_call.1} parent=5 // pred_check_branch
        %213 = sbr.rel (%p211) target = $region32
      $region31: #{tpu_custom_call.1} parent=5 // pred_region
        // Predicated region
        $region33: #{tpu_custom_call.1} parent=31 // pred_check
          %p214 = pneg %p39
        $region34: #{tpu_custom_call.1} parent=31 // pred_check_branch
          %216 = sbr.rel (%p214) target = $region36
        $region35: #{tpu_custom_call.1} parent=31 // pred_region
          %s217 = sand.u32 %s29, 1
          %s218 = scalar_lea.sflag [#allocation3], %s217
          %s219 = sand.u32 %s29, 1
          %s220 = smul.addr %s219, 8
          %s221 = scalar_lea.vmem [#allocation2], %s220
          %s223 = ssub.s32 128, 128
          %224 = vsyncadd %s218, %s223
          %s225 = smul.addr %s19, 128
          %s226 = scalar_lea.hbm %s0, %s225
          %s228 = sshll.u32 %s221, 4
          %s229 = int_to_ptr.vmem [resolvable:$true] %s228
          %231 = dma.hbm_to_vmem [thread:$0]  %s226, 128, %s229, %s218
        $region36: #{tpu_custom_call.1} parent=31 // pred_fallthru
          _
      $region32: #{tpu_custom_call.1} parent=5 // pred_fallthru
        _
      %p232 = scmp.le.s32.totalorder 1, %s19
      %p233 = scmp.lt.s32.totalorder %s19, 3
      %p234 = pnand %p232, %p233
      %p235 = pneg %p234
      // Predicated region
      $region37: #{tpu_custom_call.1} parent=5 // pred_check
        _
      $region38: #{tpu_custom_call.1} parent=5 // pred_check_branch
        %237 = sbr.rel (%p234) target = $region40
      $region39: #{tpu_custom_call.1} parent=5 // pred_region
        %s238 = ssub.s32 %s19, 1
        %s239 = sand.u32 %s32, 1
        %s240 = scalar_lea.sflag [#allocation3], %s239
        %s241 = sand.u32 %s32, 1
        %s242 = smul.addr %s241, 8
        %s243 = scalar_lea.vmem [#allocation2], %s242
        // Predicated region
        $region41: #{tpu_custom_call.1} parent=39 // pred_check
          %p244 = pneg %p45
        $region42: #{tpu_custom_call.1} parent=39 // pred_check_branch
          %246 = sbr.rel (%p244) target = $region44
        $region43: #{tpu_custom_call.1} parent=39 // pred_region
          %247 = dma.done %s240, 128
        $region44: #{tpu_custom_call.1} parent=39 // pred_fallthru
          _
        // Predicated region
        $region45: #{tpu_custom_call.1} parent=39 // pred_check
          %p248 = pneg %p66
        $region46: #{tpu_custom_call.1} parent=39 // pred_check_branch
          %250 = sbr.rel (%p248) target = $region48
        $region47: #{tpu_custom_call.1} parent=39 // pred_region
          %251 = dma.done [#allocation6], 256
        $region48: #{tpu_custom_call.1} parent=39 // pred_fallthru
          _
        // Predicated region
        $region49: #{tpu_custom_call.1} parent=39 // pred_check
          %p252 = pneg %p87
        $region50: #{tpu_custom_call.1} parent=39 // pred_check_branch
          %254 = sbr.rel (%p252) target = $region52
        $region51: #{tpu_custom_call.1} parent=39 // pred_region
          %255 = dma.done [#allocation6], 256
        $region52: #{tpu_custom_call.1} parent=39 // pred_fallthru
          _
        // Predicated region
        $region53: #{tpu_custom_call.1} parent=39 // pred_check
          %p256 = pneg %p129
        $region54: #{tpu_custom_call.1} parent=39 // pred_check_branch
          %258 = sbr.rel (%p256) target = $region56
        $region55: #{tpu_custom_call.1} parent=39 // pred_region
          %259 = dma.done [#allocation9], 128
        $region56: #{tpu_custom_call.1} parent=39 // pred_fallthru
          _
        %s260 = sand.u32 %s32, 1
        %s261 = scalar_lea.sflag [#allocation3], %s260
        %s262 = sand.u32 %s32, 1
        %s263 = smul.addr %s262, 8
        %s264 = scalar_lea.vmem [#allocation2], %s263
        %p265 = pneg %p45
        %p266 = pneg %p42
        %p267 = pneg %p66
        %p268 = pneg %p63
        %p269 = pneg %p87
        %p270 = pneg %p84
        %p271 = pneg %p108
        %p272 = pneg %p105
        %p273 = pneg %p129
        %p274 = pneg %p126
        %p275 = pneg %p155
        %p276 = pneg %p152
        %s277 = sand.u32 %s142, 1
        %s278 = scalar_lea.sflag [#allocation4], %s277
        %s279 = sand.u32 %s142, 1
        %s280 = smul.addr %s279, 8
        %s281 = scalar_lea.vmem [#allocation10], %s280
        %v283 = vld [vmem:[%s243] sm:$0xff]
        %v284 = vpack.c.bf16 %v283, %v283
        %v285 = vld [vmem:[#allocation5] sm:$0xf]
        %v286 = vld [vmem:[#allocation5 + $0x4] sm:$0xf]
        %v287 = vld [vmem:[#allocation5 + $0x8] sm:$0xf]
        %v288 = vld [vmem:[#allocation5 + $0xc] sm:$0xf]
        %v293 = vunpack.c.l.b16 %v285
        %v294 = vunpack.c.l.b16 %v286
        %v295 = vunpack.c.l.b16 %v287
        %v296 = vunpack.c.l.b16 %v288
        %v297 = vpack.c.b16 %v294, %v293
        %v298 = vpack.c.b16 %v296, %v295
        %vm301 = vcmask 261120
        %v303 = vsel %vm301, %v284, 0
        %305 = vmatprep.subr.bf16.mxu0 0
        %306 = vmatpush1.bf16.msra.mxu0 0
        %307 = vmatprep.subr.bf16.mxu0 0
        %308 = vmatpush1.bf16.msra.mxu0 0
        %309 = vmatprep.subr.bf16.mxu0 0
        %310 = vmatpush1.bf16.msra.mxu0 0
        %311 = vmatprep.subr.bf16.mxu0 0
        %312 = vmatpush1.bf16.msra.mxu0 0
        %313 = vmatprep.subr.bf16.mxu0 0
        %314 = vmatpush1.bf16.msra.mxu0 0
        %315 = vmatprep.subr.bf16.mxu0 0
        %316 = vmatpush1.bf16.msra.mxu0 0
        %317 = vmatprep.subr.bf16.mxu0 0
        %318 = vmatpush1.bf16.msra.mxu0 %v298
        %319 = vmatprep.subr.bf16.mxu0 0
        %320 = vmatpush1.bf16.msra.mxu0 %v297
        %321 = vmatprep.subr.bf16.mxu0 0
        %322 = vmatpush2.bf16.msra.mxu0 0
        %323 = vmatprep.subr.bf16.mxu0 0
        %324 = vmatpush2.bf16.msra.mxu0 0
        %325 = vmatprep.subr.bf16.mxu0 0
        %326 = vmatpush2.bf16.msra.mxu0 0
        %327 = vmatprep.subr.bf16.mxu0 0
        %328 = vmatpush2.bf16.msra.mxu0 0
        %329 = vmatprep.subr.bf16.mxu0 0
        %330 = vmatpush2.bf16.msra.mxu0 0
        %331 = vmatprep.subr.bf16.mxu0 0
        %332 = vmatpush2.bf16.msra.mxu0 0
        %333 = vmatprep.subr.bf16.mxu0 0
        %334 = vmatpush2.bf16.msra.mxu0 0
        %335 = vmatprep.subr.bf16.mxu0 0
        %336 = vmatpush2.bf16.msra.mxu0 0
        %337 = vmatprep.mubr.bf16.mxu0 0
        %338 = vmatmul.mubr.bf16.gmra.mxu0 %v303
        %v339 = vpop.f32.mrf.mxu0
        %v340 = vadd.f32 0.0, %v339
        %v341 = vpop.f32.mrf.mxu0
        %v342 = vpop.f32.mrf.mxu0
        %v343 = vpop.f32.mrf.mxu0
        %344 = vdwg.mxu0
        %v345 = vpack.c.bf16 %v340, %v340
        %v346 = vld [vmem:[#allocation8] sm:$0xff]
        %348 = vrot.lane.b32.xlu0 %v345, 96
        %v349 = vpop.permute.xlu0 %348
        %vm350 = vcmask 64512
        %v352 = vsel %vm350, %v345, 0
        %v355 = vsel %vm350, %v349, 0
        %357 = vmatprep.subr.bf16.mxu0 0
        %358 = vmatpush1.bf16.xpose.msra.mxu0 0
        %359 = vmatprep.subr.bf16.mxu0 0
        %360 = vmatpush1.bf16.xpose.msra.mxu0 0
        %361 = vmatprep.subr.bf16.mxu0 0
        %362 = vmatpush1.bf16.xpose.msra.mxu0 0
        %363 = vmatprep.subr.bf16.mxu0 0
        %364 = vmatpush1.bf16.xpose.msra.mxu0 0
        %365 = vmatprep.subr.bf16.mxu0 0
        %366 = vmatpush1.bf16.xpose.msra.mxu0 0
        %367 = vmatprep.subr.bf16.mxu0 0
        %368 = vmatpush1.bf16.xpose.msra.mxu0 0
        %369 = vmatprep.subr.bf16.mxu0 0
        %370 = vmatpush1.bf16.xpose.msra.mxu0 0
        %371 = vmatprep.subr.bf16.mxu0 0
        %372 = vmatpush1.bf16.xpose.msra.mxu0 %v355
        %373 = vmatprep.subr.bf16.mxu0 0
        %374 = vmatpush2.bf16.xpose.msra.mxu0 0
        %375 = vmatprep.subr.bf16.mxu0 0
        %376 = vmatpush2.bf16.xpose.msra.mxu0 0
        %377 = vmatprep.subr.bf16.mxu0 0
        %378 = vmatpush2.bf16.xpose.msra.mxu0 0
        %379 = vmatprep.subr.bf16.mxu0 0
        %380 = vmatpush2.bf16.xpose.msra.mxu0 0
        %381 = vmatprep.subr.bf16.mxu0 0
        %382 = vmatpush2.bf16.xpose.msra.mxu0 0
        %383 = vmatprep.subr.bf16.mxu0 0
        %384 = vmatpush2.bf16.xpose.msra.mxu0 0
        %385 = vmatprep.subr.bf16.mxu0 0
        %386 = vmatpush2.bf16.xpose.msra.mxu0 0
        %387 = vmatprep.subr.bf16.mxu0 0
        %388 = vmatpush2.bf16.xpose.msra.mxu0 0
        %389 = vmatprep.mubr.bf16.mxu0 0
        %390 = vmatmul.mubr.bf16.gmra.mxu0 %v352
        %v391 = vpop.f32.mrf.mxu0
        %v392 = vadd.f32 %v346, %v391
        %v393 = vpop.f32.mrf.mxu0
        %v394 = vpop.f32.mrf.mxu0
        %v395 = vpop.f32.mrf.mxu0
        %396 = vdwg.mxu0
        %v397 = vsel %vm350, %v392, -inf
        %398 = vmax.xlane.f32.xlu0 %v397
        %v399 = vpop.xlane.xlu0 %398
        %v400 = vsub.f32 %v392, %v399
        %v401 = vmul.f32 %v400, 1.442695
        %v402 = vpow.pop %v401
        %v403 = vsel %vm350, %v402, 0.0
        %404 = vadd.xlane.f32.xlu0 %v403
        %v405 = vpop.xlane.xlu0 %404
        %v406 = vpack.c.bf16 %v402, %v402
        %407 = vrot.lane.b32.xlu0 %v345, 64
        %v408 = vpop.permute.xlu0 %407
        %v410 = vsel %vm350, %v406, 0
        %vm412 = vcmask 1043456
        %v414 = vsel %vm412, %v408, 0
        %416 = vmatprep.subr.bf16.mxu0 0
        %417 = vmatpush1.bf16.msra.mxu0 0
        %418 = vmatprep.subr.bf16.mxu0 0
        %419 = vmatpush1.bf16.msra.mxu0 0
        %420 = vmatprep.subr.bf16.mxu0 0
        %421 = vmatpush1.bf16.msra.mxu0 0
        %422 = vmatprep.subr.bf16.mxu0 0
        %423 = vmatpush1.bf16.msra.mxu0 0
        %424 = vmatprep.subr.bf16.mxu0 0
        %425 = vmatpush1.bf16.msra.mxu0 0
        %426 = vmatprep.subr.bf16.mxu0 0
        %427 = vmatpush1.bf16.msra.mxu0 0
        %428 = vmatprep.subr.bf16.mxu0 0
        %429 = vmatpush1.bf16.msra.mxu0 0
        %430 = vmatprep.subr.bf16.mxu0 0
        %431 = vmatpush1.bf16.msra.mxu0 %v414
        %432 = vmatprep.subr.bf16.mxu0 0
        %433 = vmatpush2.bf16.msra.mxu0 0
        %434 = vmatprep.subr.bf16.mxu0 0
        %435 = vmatpush2.bf16.msra.mxu0 0
        %436 = vmatprep.subr.bf16.mxu0 0
        %437 = vmatpush2.bf16.msra.mxu0 0
        %438 = vmatprep.subr.bf16.mxu0 0
        %439 = vmatpush2.bf16.msra.mxu0 0
        %440 = vmatprep.subr.bf16.mxu0 0
        %441 = vmatpush2.bf16.msra.mxu0 0
        %442 = vmatprep.subr.bf16.mxu0 0
        %443 = vmatpush2.bf16.msra.mxu0 0
        %444 = vmatprep.subr.bf16.mxu0 0
        %445 = vmatpush2.bf16.msra.mxu0 0
        %446 = vmatprep.subr.bf16.mxu0 0
        %447 = vmatpush2.bf16.msra.mxu0 0
        %448 = vmatprep.mubr.bf16.mxu0 0
        %449 = vmatmul.mubr.bf16.gmra.mxu0 %v410
        %v450 = vpop.f32.mrf.mxu0
        %v451 = vadd.f32 0.0, %v450
        %v452 = vpop.f32.mrf.mxu0
        %v453 = vpop.f32.mrf.mxu0
        %v454 = vpop.f32.mrf.mxu0
        %455 = vdwg.mxu0
        %v456 = vrcp.pop %v405
        %v457 = vmul.f32 %v451, %v456
        %458 = vrot.lane.b32.xlu0 %v345, 120
        %v459 = vpop.permute.xlu0 %458
        %460 = vrot.lane.b32.xlu0 %v345, 88
        %v461 = vpop.permute.xlu0 %460
        %v463 = vsel %vm350, %v459, 0
        %v466 = vsel %vm350, %v461, 0
        %468 = vmatprep.subr.bf16.mxu0 0
        %469 = vmatpush1.bf16.xpose.msra.mxu0 0
        %470 = vmatprep.subr.bf16.mxu0 0
        %471 = vmatpush1.bf16.xpose.msra.mxu0 0
        %472 = vmatprep.subr.bf16.mxu0 0
        %473 = vmatpush1.bf16.xpose.msra.mxu0 0
        %474 = vmatprep.subr.bf16.mxu0 0
        %475 = vmatpush1.bf16.xpose.msra.mxu0 0
        %476 = vmatprep.subr.bf16.mxu0 0
        %477 = vmatpush1.bf16.xpose.msra.mxu0 0
        %478 = vmatprep.subr.bf16.mxu0 0
        %479 = vmatpush1.bf16.xpose.msra.mxu0 0
        %480 = vmatprep.subr.bf16.mxu0 0
        %481 = vmatpush1.bf16.xpose.msra.mxu0 0
        %482 = vmatprep.subr.bf16.mxu0 0
        %483 = vmatpush1.bf16.xpose.msra.mxu0 %v466
        %484 = vmatprep.subr.bf16.mxu0 0
        %485 = vmatpush2.bf16.xpose.msra.mxu0 0
        %486 = vmatprep.subr.bf16.mxu0 0
        %487 = vmatpush2.bf16.xpose.msra.mxu0 0
        %488 = vmatprep.subr.bf16.mxu0 0
        %489 = vmatpush2.bf16.xpose.msra.mxu0 0
        %490 = vmatprep.subr.bf16.mxu0 0
        %491 = vmatpush2.bf16.xpose.msra.mxu0 0
        %492 = vmatprep.subr.bf16.mxu0 0
        %493 = vmatpush2.bf16.xpose.msra.mxu0 0
        %494 = vmatprep.subr.bf16.mxu0 0
        %495 = vmatpush2.bf16.xpose.msra.mxu0 0
        %496 = vmatprep.subr.bf16.mxu0 0
        %497 = vmatpush2.bf16.xpose.msra.mxu0 0
        %498 = vmatprep.subr.bf16.mxu0 0
        %499 = vmatpush2.bf16.xpose.msra.mxu0 0
        %500 = vmatprep.mubr.bf16.mxu0 0
        %501 = vmatmul.mubr.bf16.gmra.mxu0 %v463
        %v502 = vpop.f32.mrf.mxu0
        %v503 = vadd.f32 %v346, %v502
        %v504 = vpop.f32.mrf.mxu0
        %v505 = vpop.f32.mrf.mxu0
        %v506 = vpop.f32.mrf.mxu0
        %507 = vdwg.mxu0
        %v508 = vsel %vm350, %v503, -inf
        %509 = vmax.xlane.f32.xlu0 %v508
        %v510 = vpop.xlane.xlu0 %509
        %v511 = vsub.f32 %v503, %v510
        %v512 = vmul.f32 %v511, 1.442695
        %v513 = vpow.pop %v512
        %v514 = vsel %vm350, %v513, 0.0
        %515 = vadd.xlane.f32.xlu0 %v514
        %v516 = vpop.xlane.xlu0 %515
        %v517 = vpack.c.bf16 %v513, %v513
        %518 = vrot.lane.b32.xlu0 %v345, 56
        %v519 = vpop.permute.xlu0 %518
        %v521 = vsel %vm350, %v517, 0
        %v524 = vsel %vm412, %v519, 0
        %526 = vmatprep.subr.bf16.mxu0 0
        %527 = vmatpush1.bf16.msra.mxu0 0
        %528 = vmatprep.subr.bf16.mxu0 0
        %529 = vmatpush1.bf16.msra.mxu0 0
        %530 = vmatprep.subr.bf16.mxu0 0
        %531 = vmatpush1.bf16.msra.mxu0 0
        %532 = vmatprep.subr.bf16.mxu0 0
        %533 = vmatpush1.bf16.msra.mxu0 0
        %534 = vmatprep.subr.bf16.mxu0 0
        %535 = vmatpush1.bf16.msra.mxu0 0
        %536 = vmatprep.subr.bf16.mxu0 0
        %537 = vmatpush1.bf16.msra.mxu0 0
        %538 = vmatprep.subr.bf16.mxu0 0
        %539 = vmatpush1.bf16.msra.mxu0 0
        %540 = vmatprep.subr.bf16.mxu0 0
        %541 = vmatpush1.bf16.msra.mxu0 %v524
        %542 = vmatprep.subr.bf16.mxu0 0
        %543 = vmatpush2.bf16.msra.mxu0 0
        %544 = vmatprep.subr.bf16.mxu0 0
        %545 = vmatpush2.bf16.msra.mxu0 0
        %546 = vmatprep.subr.bf16.mxu0 0
        %547 = vmatpush2.bf16.msra.mxu0 0
        %548 = vmatprep.subr.bf16.mxu0 0
        %549 = vmatpush2.bf16.msra.mxu0 0
        %550 = vmatprep.subr.bf16.mxu0 0
        %551 = vmatpush2.bf16.msra.mxu0 0
        %552 = vmatprep.subr.bf16.mxu0 0
        %553 = vmatpush2.bf16.msra.mxu0 0
        %554 = vmatprep.subr.bf16.mxu0 0
        %555 = vmatpush2.bf16.msra.mxu0 0
        %556 = vmatprep.subr.bf16.mxu0 0
        %557 = vmatpush2.bf16.msra.mxu0 0
        %558 = vmatprep.mubr.bf16.mxu0 0
        %559 = vmatmul.mubr.bf16.gmra.mxu0 %v521
        %v560 = vpop.f32.mrf.mxu0
        %v561 = vadd.f32 0.0, %v560
        %v562 = vpop.f32.mrf.mxu0
        %v563 = vpop.f32.mrf.mxu0
        %v564 = vpop.f32.mrf.mxu0
        %565 = vdwg.mxu0
        %v566 = vrcp.pop %v516
        %v567 = vmul.f32 %v561, %v566
        %568 = vrot.lane.b32.xlu0 %v345, 112
        %v569 = vpop.permute.xlu0 %568
        %570 = vrot.lane.b32.xlu0 %v345, 80
        %v571 = vpop.permute.xlu0 %570
        %v573 = vsel %vm350, %v569, 0
        %v576 = vsel %vm350, %v571, 0
        %578 = vmatprep.subr.bf16.mxu0 0
        %579 = vmatpush1.bf16.xpose.msra.mxu0 0
        %580 = vmatprep.subr.bf16.mxu0 0
        %581 = vmatpush1.bf16.xpose.msra.mxu0 0
        %582 = vmatprep.subr.bf16.mxu0 0
        %583 = vmatpush1.bf16.xpose.msra.mxu0 0
        %584 = vmatprep.subr.bf16.mxu0 0
        %585 = vmatpush1.bf16.xpose.msra.mxu0 0
        %586 = vmatprep.subr.bf16.mxu0 0
        %587 = vmatpush1.bf16.xpose.msra.mxu0 0
        %588 = vmatprep.subr.bf16.mxu0 0
        %589 = vmatpush1.bf16.xpose.msra.mxu0 0
        %590 = vmatprep.subr.bf16.mxu0 0
        %591 = vmatpush1.bf16.xpose.msra.mxu0 0
        %592 = vmatprep.subr.bf16.mxu0 0
        %593 = vmatpush1.bf16.xpose.msra.mxu0 %v576
        %594 = vmatprep.subr.bf16.mxu0 0
        %595 = vmatpush2.bf16.xpose.msra.mxu0 0
        %596 = vmatprep.subr.bf16.mxu0 0
        %597 = vmatpush2.bf16.xpose.msra.mxu0 0
        %598 = vmatprep.subr.bf16.mxu0 0
        %599 = vmatpush2.bf16.xpose.msra.mxu0 0
        %600 = vmatprep.subr.bf16.mxu0 0
        %601 = vmatpush2.bf16.xpose.msra.mxu0 0
        %602 = vmatprep.subr.bf16.mxu0 0
        %603 = vmatpush2.bf16.xpose.msra.mxu0 0
        %604 = vmatprep.subr.bf16.mxu0 0
        %605 = vmatpush2.bf16.xpose.msra.mxu0 0
        %606 = vmatprep.subr.bf16.mxu0 0
        %607 = vmatpush2.bf16.xpose.msra.mxu0 0
        %608 = vmatprep.subr.bf16.mxu0 0
        %609 = vmatpush2.bf16.xpose.msra.mxu0 0
        %610 = vmatprep.mubr.bf16.mxu0 0
        %611 = vmatmul.mubr.bf16.gmra.mxu0 %v573
        %v612 = vpop.f32.mrf.mxu0
        %v613 = vadd.f32 %v346, %v612
        %v614 = vpop.f32.mrf.mxu0
        %v615 = vpop.f32.mrf.mxu0
        %v616 = vpop.f32.mrf.mxu0
        %617 = vdwg.mxu0
        %v618 = vsel %vm350, %v613, -inf
        %619 = vmax.xlane.f32.xlu0 %v618
        %v620 = vpop.xlane.xlu0 %619
        %v621 = vsub.f32 %v613, %v620
        %v622 = vmul.f32 %v621, 1.442695
        %v623 = vpow.pop %v622
        %v624 = vsel %vm350, %v623, 0.0
        %625 = vadd.xlane.f32.xlu0 %v624
        %v626 = vpop.xlane.xlu0 %625
        %v627 = vpack.c.bf16 %v623, %v623
        %628 = vrot.lane.b32.xlu0 %v345, 48
        %v629 = vpop.permute.xlu0 %628
        %v631 = vsel %vm350, %v627, 0
        %v634 = vsel %vm412, %v629, 0
        %636 = vmatprep.subr.bf16.mxu0 0
        %637 = vmatpush1.bf16.msra.mxu0 0
        %638 = vmatprep.subr.bf16.mxu0 0
        %639 = vmatpush1.bf16.msra.mxu0 0
        %640 = vmatprep.subr.bf16.mxu0 0
        %641 = vmatpush1.bf16.msra.mxu0 0
        %642 = vmatprep.subr.bf16.mxu0 0
        %643 = vmatpush1.bf16.msra.mxu0 0
        %644 = vmatprep.subr.bf16.mxu0 0
        %645 = vmatpush1.bf16.msra.mxu0 0
        %646 = vmatprep.subr.bf16.mxu0 0
        %647 = vmatpush1.bf16.msra.mxu0 0
        %648 = vmatprep.subr.bf16.mxu0 0
        %649 = vmatpush1.bf16.msra.mxu0 0
        %650 = vmatprep.subr.bf16.mxu0 0
        %651 = vmatpush1.bf16.msra.mxu0 %v634
        %652 = vmatprep.subr.bf16.mxu0 0
        %653 = vmatpush2.bf16.msra.mxu0 0
        %654 = vmatprep.subr.bf16.mxu0 0
        %655 = vmatpush2.bf16.msra.mxu0 0
        %656 = vmatprep.subr.bf16.mxu0 0
        %657 = vmatpush2.bf16.msra.mxu0 0
        %658 = vmatprep.subr.bf16.mxu0 0
        %659 = vmatpush2.bf16.msra.mxu0 0
        %660 = vmatprep.subr.bf16.mxu0 0
        %661 = vmatpush2.bf16.msra.mxu0 0
        %662 = vmatprep.subr.bf16.mxu0 0
        %663 = vmatpush2.bf16.msra.mxu0 0
        %664 = vmatprep.subr.bf16.mxu0 0
        %665 = vmatpush2.bf16.msra.mxu0 0
        %666 = vmatprep.subr.bf16.mxu0 0
        %667 = vmatpush2.bf16.msra.mxu0 0
        %668 = vmatprep.mubr.bf16.mxu0 0
        %669 = vmatmul.mubr.bf16.gmra.mxu0 %v631
        %v670 = vpop.f32.mrf.mxu0
        %v671 = vadd.f32 0.0, %v670
        %v672 = vpop.f32.mrf.mxu0
        %v673 = vpop.f32.mrf.mxu0
        %v674 = vpop.f32.mrf.mxu0
        %675 = vdwg.mxu0
        %v676 = vrcp.pop %v626
        %v677 = vmul.f32 %v671, %v676
        %678 = vrot.lane.b32.xlu0 %v345, 104
        %v679 = vpop.permute.xlu0 %678
        %680 = vrot.lane.b32.xlu0 %v345, 72
        %v681 = vpop.permute.xlu0 %680
        %v683 = vsel %vm350, %v679, 0
        %v686 = vsel %vm350, %v681, 0
        %688 = vmatprep.subr.bf16.mxu0 0
        %689 = vmatpush1.bf16.xpose.msra.mxu0 0
        %690 = vmatprep.subr.bf16.mxu0 0
        %691 = vmatpush1.bf16.xpose.msra.mxu0 0
        %692 = vmatprep.subr.bf16.mxu0 0
        %693 = vmatpush1.bf16.xpose.msra.mxu0 0
        %694 = vmatprep.subr.bf16.mxu0 0
        %695 = vmatpush1.bf16.xpose.msra.mxu0 0
        %696 = vmatprep.subr.bf16.mxu0 0
        %697 = vmatpush1.bf16.xpose.msra.mxu0 0
        %698 = vmatprep.subr.bf16.mxu0 0
        %699 = vmatpush1.bf16.xpose.msra.mxu0 0
        %700 = vmatprep.subr.bf16.mxu0 0
        %701 = vmatpush1.bf16.xpose.msra.mxu0 0
        %702 = vmatprep.subr.bf16.mxu0 0
        %703 = vmatpush1.bf16.xpose.msra.mxu0 %v686
        %704 = vmatprep.subr.bf16.mxu0 0
        %705 = vmatpush2.bf16.xpose.msra.mxu0 0
        %706 = vmatprep.subr.bf16.mxu0 0
        %707 = vmatpush2.bf16.xpose.msra.mxu0 0
        %708 = vmatprep.subr.bf16.mxu0 0
        %709 = vmatpush2.bf16.xpose.msra.mxu0 0
        %710 = vmatprep.subr.bf16.mxu0 0
        %711 = vmatpush2.bf16.xpose.msra.mxu0 0
        %712 = vmatprep.subr.bf16.mxu0 0
        %713 = vmatpush2.bf16.xpose.msra.mxu0 0
        %714 = vmatprep.subr.bf16.mxu0 0
        %715 = vmatpush2.bf16.xpose.msra.mxu0 0
        %716 = vmatprep.subr.bf16.mxu0 0
        %717 = vmatpush2.bf16.xpose.msra.mxu0 0
        %718 = vmatprep.subr.bf16.mxu0 0
        %719 = vmatpush2.bf16.xpose.msra.mxu0 0
        %720 = vmatprep.mubr.bf16.mxu0 0
        %721 = vmatmul.mubr.bf16.gmra.mxu0 %v683
        %v722 = vpop.f32.mrf.mxu0
        %v723 = vadd.f32 %v346, %v722
        %v724 = vpop.f32.mrf.mxu0
        %v725 = vpop.f32.mrf.mxu0
        %v726 = vpop.f32.mrf.mxu0
        %727 = vdwg.mxu0
        %v728 = vsel %vm350, %v723, -inf
        %729 = vmax.xlane.f32.xlu0 %v728
        %v730 = vpop.xlane.xlu0 %729
        %v731 = vsub.f32 %v723, %v730
        %v732 = vmul.f32 %v731, 1.442695
        %v733 = vpow.pop %v732
        %v734 = vsel %vm350, %v733, 0.0
        %735 = vadd.xlane.f32.xlu0 %v734
        %v736 = vpop.xlane.xlu0 %735
        %v737 = vpack.c.bf16 %v733, %v733
        %738 = vrot.lane.b32.xlu0 %v345, 40
        %v739 = vpop.permute.xlu0 %738
        %v741 = vsel %vm350, %v737, 0
        %v744 = vsel %vm412, %v739, 0
        %746 = vmatprep.subr.bf16.mxu0 0
        %747 = vmatpush1.bf16.msra.mxu0 0
        %748 = vmatprep.subr.bf16.mxu0 0
        %749 = vmatpush1.bf16.msra.mxu0 0
        %750 = vmatprep.subr.bf16.mxu0 0
        %751 = vmatpush1.bf16.msra.mxu0 0
        %752 = vmatprep.subr.bf16.mxu0 0
        %753 = vmatpush1.bf16.msra.mxu0 0
        %754 = vmatprep.subr.bf16.mxu0 0
        %755 = vmatpush1.bf16.msra.mxu0 0
        %756 = vmatprep.subr.bf16.mxu0 0
        %757 = vmatpush1.bf16.msra.mxu0 0
        %758 = vmatprep.subr.bf16.mxu0 0
        %759 = vmatpush1.bf16.msra.mxu0 0
        %760 = vmatprep.subr.bf16.mxu0 0
        %761 = vmatpush1.bf16.msra.mxu0 %v744
        %762 = vmatprep.subr.bf16.mxu0 0
        %763 = vmatpush2.bf16.msra.mxu0 0
        %764 = vmatprep.subr.bf16.mxu0 0
        %765 = vmatpush2.bf16.msra.mxu0 0
        %766 = vmatprep.subr.bf16.mxu0 0
        %767 = vmatpush2.bf16.msra.mxu0 0
        %768 = vmatprep.subr.bf16.mxu0 0
        %769 = vmatpush2.bf16.msra.mxu0 0
        %770 = vmatprep.subr.bf16.mxu0 0
        %771 = vmatpush2.bf16.msra.mxu0 0
        %772 = vmatprep.subr.bf16.mxu0 0
        %773 = vmatpush2.bf16.msra.mxu0 0
        %774 = vmatprep.subr.bf16.mxu0 0
        %775 = vmatpush2.bf16.msra.mxu0 0
        %776 = vmatprep.subr.bf16.mxu0 0
        %777 = vmatpush2.bf16.msra.mxu0 0
        %778 = vmatprep.mubr.bf16.mxu0 0
        %779 = vmatmul.mubr.bf16.gmra.mxu0 %v741
        %v780 = vpop.f32.mrf.mxu0
        %v781 = vadd.f32 0.0, %v780
        %v782 = vpop.f32.mrf.mxu0
        %v783 = vpop.f32.mrf.mxu0
        %v784 = vpop.f32.mrf.mxu0
        %785 = vdwg.mxu0
        %v786 = vrcp.pop %v736
        %v787 = vmul.f32 %v781, %v786
        %789 = vrot.lane.b32.xlu0 %v567, 8
        %v790 = vpop.permute.xlu0 %789
        %793 = vrot.lane.b32.xlu0 %v677, 16
        %v794 = vpop.permute.xlu0 %793
        %797 = vrot.lane.b32.xlu0 %v787, 24
        %v798 = vpop.permute.xlu0 %797
        %v800 = vsel %vm350, %v457, %v790
        %vm801 = vcmask 130048
        %v802 = vsel %vm801, %v800, %v794
        %vm803 = vcmask 195584
        %v804 = vsel %vm803, %v802, %v798
        %v805 = vpack.c.bf16 %v804, %v804
        %v806 = vld [vmem:[#allocation7] sm:$0xf]
        %v807 = vld [vmem:[#allocation7 + $0x4] sm:$0xf]
        %v808 = vld [vmem:[#allocation7 + $0x8] sm:$0xf]
        %v809 = vld [vmem:[#allocation7 + $0xc] sm:$0xf]
        %v810 = vld [vmem:[%s3] sm:$0x1]
        %v812 = vlaneseq
        %v813 = vshrl.u32 %v812, 7
        %v814 = vsub.s32 0, %v813
        %v815 = vrot.slane %v810, %v814
        %v821 = vunpack.c.l.b16 %v806
        %v822 = vunpack.c.l.b16 %v807
        %v823 = vunpack.c.l.b16 %v808
        %v824 = vunpack.c.l.b16 %v809
        %v825 = vpack.c.b16 %v822, %v821
        %v826 = vpack.c.b16 %v824, %v823
        %v830 = vsel %vm301, %v805, 0
        %832 = vmatprep.subr.bf16.mxu0 0
        %833 = vmatpush1.bf16.msra.mxu0 0
        %834 = vmatprep.subr.bf16.mxu0 0
        %835 = vmatpush1.bf16.msra.mxu0 0
        %836 = vmatprep.subr.bf16.mxu0 0
        %837 = vmatpush1.bf16.msra.mxu0 0
        %838 = vmatprep.subr.bf16.mxu0 0
        %839 = vmatpush1.bf16.msra.mxu0 0
        %840 = vmatprep.subr.bf16.mxu0 0
        %841 = vmatpush1.bf16.msra.mxu0 0
        %842 = vmatprep.subr.bf16.mxu0 0
        %843 = vmatpush1.bf16.msra.mxu0 0
        %844 = vmatprep.subr.bf16.mxu0 0
        %845 = vmatpush1.bf16.msra.mxu0 %v826
        %846 = vmatprep.subr.bf16.mxu0 0
        %847 = vmatpush1.bf16.msra.mxu0 %v825
        %848 = vmatprep.subr.bf16.mxu0 0
        %849 = vmatpush2.bf16.msra.mxu0 0
        %850 = vmatprep.subr.bf16.mxu0 0
        %851 = vmatpush2.bf16.msra.mxu0 0
        %852 = vmatprep.subr.bf16.mxu0 0
        %853 = vmatpush2.bf16.msra.mxu0 0
        %854 = vmatprep.subr.bf16.mxu0 0
        %855 = vmatpush2.bf16.msra.mxu0 0
        %856 = vmatprep.subr.bf16.mxu0 0
        %857 = vmatpush2.bf16.msra.mxu0 0
        %858 = vmatprep.subr.bf16.mxu0 0
        %859 = vmatpush2.bf16.msra.mxu0 0
        %860 = vmatprep.subr.bf16.mxu0 0
        %861 = vmatpush2.bf16.msra.mxu0 0
        %862 = vmatprep.subr.bf16.mxu0 0
        %863 = vmatpush2.bf16.msra.mxu0 0
        %864 = vmatprep.mubr.bf16.mxu0 0
        %865 = vmatmul.mubr.bf16.gmra.mxu0 %v830
        %v866 = vpop.f32.mrf.mxu0
        %v867 = vadd.f32 %v815, %v866
        %v868 = vpop.f32.mrf.mxu0
        %v869 = vpop.f32.mrf.mxu0
        %v870 = vpop.f32.mrf.mxu0
        %871 = vdwg.mxu0
        %872 = vst.msk [vmem:[%s281] sm:$0xff] %vm301, %v867
        %s873 = sand.u32 %s142, 1
        %s874 = scalar_lea.sflag [#allocation4], %s873
        %s875 = sand.u32 %s142, 1
        %s876 = smul.addr %s875, 8
        %s877 = scalar_lea.vmem [#allocation10], %s876
        // Predicated region
        $region57: #{tpu_custom_call.1} parent=39 // pred_check
          %p878 = pneg %p152
        $region58: #{tpu_custom_call.1} parent=39 // pred_check_branch
          %880 = sbr.rel (%p878) target = $region60
        $region59: #{tpu_custom_call.1} parent=39 // pred_region
          %s882 = ssub.s32 128, 128
          %883 = vsyncadd %s874, %s882
          %s884 = smul.addr %s24, 128
          %s885 = scalar_lea.hbm %s5, %s884
          %s887 = sshll.u32 %s877, 4
          %s888 = int_to_ptr.vmem [resolvable:$true] %s887
          %890 = dma.vmem_to_hbm [thread:$0]  %s888, 128, %s885, %s874
        $region60: #{tpu_custom_call.1} parent=39 // pred_fallthru
          _
      $region40: #{tpu_custom_call.1} parent=5 // pred_fallthru
        _
      %p891 = scmp.le.s32.totalorder 2, %s19
      // Predicated region
      $region61: #{tpu_custom_call.1} parent=5 // pred_check
        %p892 = pneg %p891
      $region62: #{tpu_custom_call.1} parent=5 // pred_check_branch
        %894 = sbr.rel (%p892) target = $region64
      $region63: #{tpu_custom_call.1} parent=5 // pred_region
        %s895 = ssub.s32 %s19, 2
        // Predicated region
        $region65: #{tpu_custom_call.1} parent=63 // pred_check
          %p896 = pneg %p158
        $region66: #{tpu_custom_call.1} parent=63 // pred_check_branch
          %898 = sbr.rel (%p896) target = $region68
        $region67: #{tpu_custom_call.1} parent=63 // pred_region
          %s899 = sand.u32 %s143, 1
          %s900 = scalar_lea.sflag [#allocation4], %s899
          %s901 = sand.u32 %s143, 1
          %s902 = smul.addr %s901, 8
          %s903 = scalar_lea.vmem [#allocation10], %s902
          %904 = dma.done %s900, 128
        $region68: #{tpu_custom_call.1} parent=63 // pred_fallthru
          _
      $region64: #{tpu_custom_call.1} parent=5 // pred_fallthru
        _
    $region6: #{tpu_custom_call.1} parent=1 // loop_footer
      %s23 = sadd.s32 1, %s19
    $region7: #{tpu_custom_call.1} parent=1 // loop_footer_branch
      %18 = sbr.rel target = $region3
    $region8: #{tpu_custom_call.1} parent=1 // loop_exit
      _
    %905 = vsyncpa [#allocation3], 1
    %s906 = scalar_lea.sflag [#allocation3], 1
    %907 = vsyncpa %s906, 1
    %908 = vsyncpa [#allocation6], 1
    %909 = vsyncpa [#allocation9], 1
    %910 = vsyncpa [#allocation4], 1
    %s911 = scalar_lea.sflag [#allocation4], 1
    %912 = vsyncpa %s911, 1

</llo_original>
